<compile_context>
chip_gen: v7x
topology: tpu7x:2x2x1
jax: 0.10.0
libtpu: 0.0.40
codegen_flags: <defaults>
</compile_context>

<pallas_src>
import jax
import jax.numpy as jnp
from jax.experimental import pallas as pl
from jax.experimental.pallas import tpu as pltpu

# ----------------------------------------------------------------------------
# Problem sizes (X.shape[1] is unknown in the original script; pick D=32).
# ----------------------------------------------------------------------------
D_IN = 32     # X.shape[1]
H1 = 64
H2 = 32
D_OUT = 1
TB_MAX = 1024  # max batch tile per grid step (multiple of 128)
SUB = 256      # rows per in-kernel sub-block (caps the vreg working set)


def _make_mlp_kernel(tb, sub):
    """Build the fused 3-layer MLP kernel for a (tb, D_IN) batch tile.

    x_ref:  (tb, D_IN)  bf16
    w1_ref: (D_IN, H1)  bf16    b1_ref: (1, H1) f32
    w2_ref: (H1, H2)    bf16    b2_ref: (1, H2) f32
    w3_ref: (1, H2)     f32     b3_ref: (1,)    f32 (SMEM scalar)
    o_ref:  (1, tb)     f32  -- lane-dense sigmoid probabilities
    """
    n_sub = tb // sub  # tb in {128,256,512,1024}, sub = min(tb,256) -> divides

    def mlp_kernel(x_ref, w1_ref, b1_ref, w2_ref, b2_ref, w3_ref, b3_ref, o_ref):
        # Resident weights: loaded once per grid step, reused by every sub-block.
        w1 = w1_ref[...]
        b1 = b1_ref[...]
        w2 = w2_ref[...]
        b2 = b2_ref[...]
        w3 = w3_ref[...]
        b3 = b3_ref[0]          # scalar from SMEM (no per-tile VMEM broadcast)

        # Statically-unrolled sub-block loop: keeps h1/h2 live sets small
        # (no vreg spills) while the HBM<->VMEM tile stays large.  Offsets are
        # static, so all loads/stores are plain aligned vector accesses.
        for j in range(n_sub):
            r0 = j * sub
            x = x_ref[pl.ds(r0, sub), :]                       # (sub, D_IN) bf16

            # Layers 1/2: MXU matmuls with f32 accumulation, ReLU on the VPU.
            h1 = jnp.dot(x, w1, preferred_element_type=jnp.float32) + b1
            h1 = jnp.maximum(h1, 0.0).astype(jnp.bfloat16)     # bf16 into MXU
            h2 = jnp.dot(h1, w2, preferred_element_type=jnp.float32) + b2
            h2 = jnp.maximum(h2, 0.0)                          # (sub, H2) f32

            # Layer 3 (output width 1): contract H2 between the (1, H2) weight
            # row and the (sub, H2) activations -> logits land directly as a
            # lane-dense (1, sub) row (small XLU transpose, no VMEM relayout).
            logits = jax.lax.dot_general(
                w3, h2,
                dimension_numbers=(((1,), (1,)), ((), ())),
                preferred_element_type=jnp.float32,
            ) + b3

            # Sigmoid: exp and approximate reciprocal run on the idle EUP.
            o_ref[:, pl.ds(r0, sub)] = pl.reciprocal(
                1.0 + jnp.exp(-logits), approx=True)

    return mlp_kernel


def _pick_batch_tile(B):
    """Largest tile <= TB_MAX (multiple of 128) that still gives >=2 grid steps
    when the batch allows it (keeps both v7x TensorCores busy; the extra step
    is negligible on single-core v5e/v6e)."""
    half = -(-B // 2)
    half_tile = max(128, -(-half // 128) * 128)
    for tb in (1024, 512, 256, 128):
        if tb <= half_tile:
            return tb
    return 128


def android_net_forward(x, params):
    """x: (B, D_IN) float -> (B, 1) float32 sigmoid probabilities."""
    w1, b1, w2, b2, w3, b3 = params
    B, d_in = x.shape
    assert d_in == D_IN  # TODO(synk): real X.shape[1] unknown in the original script.

    tb = _pick_batch_tile(B)
    sub = min(tb, SUB)
    n_tiles = pl.cdiv(B, tb)   # non-divisible B handled by Pallas boundary padding

    # bf16 halves the dominant HBM input traffic; in a real pipeline x would
    # already live in bf16 -- the casts here are one-time wrapper plumbing.
    x_bf16 = x.astype(jnp.bfloat16)
    w1_bf16 = w1.astype(jnp.bfloat16)
    w2_bf16 = w2.astype(jnp.bfloat16)
    w3_row = w3.reshape(1, H2).astype(jnp.float32)   # (H2,1) -> (1,H2) row
    b3_s = b3.reshape(1).astype(jnp.float32)         # SMEM scalar

    cost = pl.CostEstimate(
        flops=2 * B * (D_IN * H1 + H1 * H2 + H2 * D_OUT),
        transcendentals=2 * B,  # exp + reciprocal per output element
        bytes_accessed=(B * (D_IN * 2 + 4)                    # x bf16 in, f32 out
                        + 2 * (D_IN * H1 + H1 * H2)           # bf16 weights
                        + 4 * (H1 + H2 + H2 + 1)),            # f32 biases + w3 row
    )

    out = pl.pallas_call(
        _make_mlp_kernel(tb, sub),
        out_shape=jax.ShapeDtypeStruct((1, B), jnp.float32),
        grid=(n_tiles,),
        in_specs=[
            pl.BlockSpec((tb, D_IN), lambda i: (i, 0)),     # x: tiled over batch
            pl.BlockSpec((D_IN, H1), lambda i: (0, 0)),     # W1: resident
            pl.BlockSpec((1, H1),    lambda i: (0, 0)),     # b1
            pl.BlockSpec((H1, H2),   lambda i: (0, 0)),     # W2
            pl.BlockSpec((1, H2),    lambda i: (0, 0)),     # b2
            pl.BlockSpec((1, H2),    lambda i: (0, 0)),     # W3 as a row
            pl.BlockSpec(memory_space=pltpu.MemorySpace.SMEM),  # b3 scalar
        ],
        out_specs=pl.BlockSpec((1, tb), lambda i: (0, i)),  # lane-dense output
        compiler_params=pltpu.CompilerParams(
            dimension_semantics=("parallel",)),
        cost_estimate=cost,
    )(x_bf16, w1_bf16, b1, w2_bf16, b2, w3_row, b3_s)

    # (1, B) row-major is already batch order; restore (B, 1).
    return out.reshape(B, 1)


def init_params(key):
    """Deterministic PyTorch-style init: U(-1/sqrt(fan_in), 1/sqrt(fan_in))."""
    ks = jax.random.split(key, 6)

    def lin(kw, kb, fan_in, fan_out):
        bound = 1.0 / jnp.sqrt(fan_in)
        w = jax.random.uniform(kw, (fan_in, fan_out), jnp.float32, -bound, bound)
        b = jax.random.uniform(kb, (1, fan_out), jnp.float32, -bound, bound)
        return w, b

    w1, b1 = lin(ks[0], ks[1], D_IN, H1)
    w2, b2 = lin(ks[2], ks[3], H1, H2)
    w3, b3 = lin(ks[4], ks[5], H2, D_OUT)
    return (w1, b1, w2, b2, w3, b3)


def reference_forward_matched(x, params):
    """Reference with the kernel's numerics (bf16 MXU inputs, f32 accumulation)."""
    w1, b1, w2, b2, w3, b3 = params
    h1 = jnp.maximum(
        jnp.dot(x.astype(jnp.bfloat16), w1.astype(jnp.bfloat16),
                preferred_element_type=jnp.float32) + b1, 0.0)
    h2 = jnp.maximum(
        jnp.dot(h1.astype(jnp.bfloat16), w2.astype(jnp.bfloat16),
                preferred_element_type=jnp.float32) + b2, 0.0)
    return jax.nn.sigmoid(h2 @ w3 + b3)


def reference_forward_f32(x, params):
    """Plain f32 reference matching the PyTorch module exactly."""
    w1, b1, w2, b2, w3, b3 = params
    h1 = jnp.maximum(x @ w1 + b1, 0.0)
    h2 = jnp.maximum(h1 @ w2 + b2, 0.0)
    return jax.nn.sigmoid(h2 @ w3 + b3)


if __name__ == "__main__":
    key = jax.random.PRNGKey(0)
    kx, kp = jax.random.split(key)
    params = init_params(kp)

    # Two batch sizes to exercise both kernel paths:
    #   B=300  -> tb=256, 2 grid steps, single sub-block, partial last block.
    #   B=1200 -> tb=512, 3 grid steps, 2 sub-blocks/step, partial last block.
    # MinMaxScaler in the original script scales features to [0, 1]; emulate
    # that by sampling inputs uniformly in [0, 1].
    for B in (300, 1200):
        x = jax.random.uniform(kx, (B, D_IN), jnp.float32, 0.0, 1.0)

        out = android_net_forward(x, params)
        out = jax.block_until_ready(out)
        assert out.shape == (B, 1)

        # Tight check vs. a numerics-matched reference (bf16 matmuls, f32
        # accumulation); the residual difference is the EUP approx reciprocal.
        ref = reference_forward_matched(x, params)
        assert jnp.allclose(out, ref, atol=2e-3, rtol=2e-3), \
            f"mismatch vs bf16-matched reference (B={B})"

        # Loose sanity check vs. the exact f32 module semantics (bf16 inputs
        # introduce ~1e-3-level differences in the probabilities).
        ref32 = reference_forward_f32(x, params)
        assert jnp.allclose(out, ref32, atol=5e-2, rtol=5e-2), \
            f"mismatch vs f32 reference (B={B})"

    print("KERNEL_OK")
</pallas_src>

<mosaic_0001>
module attributes {stable_mosaic.version = 11 : i64} {
  func.func @mlp_kernel(%arg0: i32, %arg1: memref<256x32xbf16, #tpu.memory_space<vmem>>, %arg2: memref<32x64xbf16, #tpu.memory_space<vmem>>, %arg3: memref<1x64xf32, #tpu.memory_space<vmem>>, %arg4: memref<64x32xbf16, #tpu.memory_space<vmem>>, %arg5: memref<1x32xf32, #tpu.memory_space<vmem>>, %arg6: memref<1x32xf32, #tpu.memory_space<vmem>>, %arg7: memref<1xf32, #tpu.memory_space<smem>>, %arg8: memref<1x256xf32, #tpu.memory_space<vmem>>) attributes {dimension_semantics = [#tpu.dimension_semantics<parallel>], iteration_bounds = array<i64: 2>, scalar_prefetch = 0 : i64, scratch_operands = 0 : i64, tpu.core_type = #tpu.core_type<tc>, window_params = [{transform_indices = @transform_0, window_bounds = array<i64: 256, 32>}, {pipeline_mode = #tpu.pipeline_mode<synchronous>, transform_indices = @transform_1, window_bounds = array<i64: 32, 64>}, {pipeline_mode = #tpu.pipeline_mode<synchronous>, transform_indices = @transform_2, window_bounds = array<i64: 1, 64>}, {pipeline_mode = #tpu.pipeline_mode<synchronous>, transform_indices = @transform_3, window_bounds = array<i64: 64, 32>}, {pipeline_mode = #tpu.pipeline_mode<synchronous>, transform_indices = @transform_4, window_bounds = array<i64: 1, 32>}, {pipeline_mode = #tpu.pipeline_mode<synchronous>, transform_indices = @transform_5, window_bounds = array<i64: 1, 32>}, {transform_indices = @transform_6, window_bounds = array<i64: 1>}, {transform_indices = @transform_7, window_bounds = array<i64: 1, 256>}]} {
    %c0 = arith.constant 0 : index
    %c0_0 = arith.constant 0 : index
    %0 = vector.load %arg2[%c0, %c0_0] : memref<32x64xbf16, #tpu.memory_space<vmem>>, vector<32x64xbf16>
    %c0_1 = arith.constant 0 : index
    %c0_2 = arith.constant 0 : index
    %1 = vector.load %arg3[%c0_1, %c0_2] : memref<1x64xf32, #tpu.memory_space<vmem>>, vector<1x64xf32>
    %c0_3 = arith.constant 0 : index
    %c0_4 = arith.constant 0 : index
    %2 = vector.load %arg4[%c0_3, %c0_4] : memref<64x32xbf16, #tpu.memory_space<vmem>>, vector<64x32xbf16>
    %c0_5 = arith.constant 0 : index
    %c0_6 = arith.constant 0 : index
    %3 = vector.load %arg5[%c0_5, %c0_6] : memref<1x32xf32, #tpu.memory_space<vmem>>, vector<1x32xf32>
    %c0_7 = arith.constant 0 : index
    %c0_8 = arith.constant 0 : index
    %4 = vector.load %arg6[%c0_7, %c0_8] : memref<1x32xf32, #tpu.memory_space<vmem>>, vector<1x32xf32>
    %c0_9 = arith.constant 0 : index
    %5 = memref.load %arg7[%c0_9] : memref<1xf32, #tpu.memory_space<smem>>
    %c0_10 = arith.constant 0 : index
    %c0_11 = arith.constant 0 : index
    %6 = vector.load %arg1[%c0_10, %c0_11] : memref<256x32xbf16, #tpu.memory_space<vmem>>, vector<256x32xbf16>
    %cst = arith.constant dense<0.000000e+00> : vector<256x64xf32>
    %7 = tpu.matmul %6, %0, %cst {dimension_numbers = #tpu.dot_dimension_numbers<[1], [0], [0], [1], [0, 0, 1, 1], [], []>} : vector<256x32xbf16>, vector<32x64xbf16>, vector<256x64xf32> -> vector<256x64xf32>
    %8 = vector.broadcast %1 : vector<1x64xf32> to vector<256x64xf32>
    %9 = arith.addf %7, %8 : vector<256x64xf32>
    %cst_12 = arith.constant 0.000000e+00 : f32
    %10 = vector.broadcast %cst_12 : f32 to vector<256x64xf32>
    %11 = arith.maximumf %9, %10 : vector<256x64xf32>
    %12 = arith.truncf %11 : vector<256x64xf32> to vector<256x64xbf16>
    %cst_13 = arith.constant dense<0.000000e+00> : vector<256x32xf32>
    %13 = tpu.matmul %12, %2, %cst_13 {dimension_numbers = #tpu.dot_dimension_numbers<[1], [0], [0], [1], [0, 0, 1, 1], [], []>} : vector<256x64xbf16>, vector<64x32xbf16>, vector<256x32xf32> -> vector<256x32xf32>
    %14 = vector.broadcast %3 : vector<1x32xf32> to vector<256x32xf32>
    %15 = arith.addf %13, %14 : vector<256x32xf32>
    %cst_14 = arith.constant 0.000000e+00 : f32
    %16 = vector.broadcast %cst_14 : f32 to vector<256x32xf32>
    %17 = arith.maximumf %15, %16 : vector<256x32xf32>
    %cst_15 = arith.constant dense<0.000000e+00> : vector<1x256xf32>
    %18 = tpu.matmul %4, %17, %cst_15 {dimension_numbers = #tpu.dot_dimension_numbers<[1], [1], [0], [0], [0, 0, 1, 0], [], []>} : vector<1x32xf32>, vector<256x32xf32>, vector<1x256xf32> -> vector<1x256xf32>
    %19 = vector.broadcast %5 : f32 to vector<1x256xf32>
    %20 = arith.addf %18, %19 : vector<1x256xf32>
    %cst_16 = arith.constant 0.000000e+00 : f32
    %21 = vector.broadcast %cst_16 : f32 to vector<1x256xf32>
    %22 = arith.subf %21, %20 : vector<1x256xf32>
    %23 = math.exp %22 : vector<1x256xf32>
    %cst_17 = arith.constant 1.000000e+00 : f32
    %24 = vector.broadcast %cst_17 : f32 to vector<1x256xf32>
    %25 = arith.addf %24, %23 : vector<1x256xf32>
    %26 = tpu.reciprocal %25 {approx = true} : vector<1x256xf32> -> vector<1x256xf32>
    %c0_18 = arith.constant 0 : index
    %c0_19 = arith.constant 0 : index
    %27 = vector.load %arg8[%c0_18, %c0_19] : memref<1x256xf32, #tpu.memory_space<vmem>>, vector<1x256xf32>
    tpu.vector_store %arg8[%c0_18, %c0_19], %26 {strides = array<i32>} : memref<1x256xf32, #tpu.memory_space<vmem>>, vector<1x256xf32>,
    return
  }
  func.func @transform_0(%arg0: i32) -> (i32, i32) {
    %c0_i32 = arith.constant 0 : i32
    %c0_i32_0 = arith.constant 0 : i32
    return %arg0, %c0_i32 : i32, i32
  }
  func.func @transform_1(%arg0: i32) -> (i32, i32) {
    %c0_i32 = arith.constant 0 : i32
    %c0_i32_0 = arith.constant 0 : i32
    %c0_i32_1 = arith.constant 0 : i32
    return %c0_i32, %c0_i32_0 : i32, i32
  }
  func.func @transform_2(%arg0: i32) -> (i32, i32) {
    %c0_i32 = arith.constant 0 : i32
    %c0_i32_0 = arith.constant 0 : i32
    %c0_i32_1 = arith.constant 0 : i32
    return %c0_i32, %c0_i32_0 : i32, i32
  }
  func.func @transform_3(%arg0: i32) -> (i32, i32) {
    %c0_i32 = arith.constant 0 : i32
    %c0_i32_0 = arith.constant 0 : i32
    %c0_i32_1 = arith.constant 0 : i32
    return %c0_i32, %c0_i32_0 : i32, i32
  }
  func.func @transform_4(%arg0: i32) -> (i32, i32) {
    %c0_i32 = arith.constant 0 : i32
    %c0_i32_0 = arith.constant 0 : i32
    %c0_i32_1 = arith.constant 0 : i32
    return %c0_i32, %c0_i32_0 : i32, i32
  }
  func.func @transform_5(%arg0: i32) -> (i32, i32) {
    %c0_i32 = arith.constant 0 : i32
    %c0_i32_0 = arith.constant 0 : i32
    %c0_i32_1 = arith.constant 0 : i32
    return %c0_i32, %c0_i32_0 : i32, i32
  }
  func.func @transform_6(%arg0: i32) -> i32 {
    %c0_i32 = arith.constant 0 : i32
    %c0_i32_0 = arith.constant 0 : i32
    return %c0_i32 : i32
  }
  func.func @transform_7(%arg0: i32) -> (i32, i32) {
    %c0_i32 = arith.constant 0 : i32
    %c0_i32_0 = arith.constant 0 : i32
    return %c0_i32, %arg0 : i32, i32
  }
}

</mosaic_0001>

<llo_original>
// kernel: tpu_custom_call.1
$region0: #{tpu_custom_call.1}
  #allocation0 [shape = 'u32[]', space=smem, size = 0x4, offset = 0x4, fixed_abs, tag = 'smem constant byte address 0x4 - core index']
  #allocation1 [shape = 'u32[144,128]{1,0:T(1,128)}', space=vmem, size = 0x12000, scoped, tag = 'internal scratch']
  #allocation2 [shape = 'f32[1]{0:T(128)S(6)}', space=smem, size = 0x200, scoped, tag = 'scoped memory for tpu_custom_call.1']
  %s0 = inlined_call_operand.vmem [shape: bf16[300,32], index: 0, kind: input, shape index: {}]
  %s1 = inlined_call_operand.vmem [shape: bf16[32,64], index: 1, kind: input, shape index: {}]
  %s2 = inlined_call_operand.vmem [shape: f32[1,64], index: 2, kind: input, shape index: {}]
  %s3 = inlined_call_operand.vmem [shape: bf16[64,32], index: 3, kind: input, shape index: {}]
  %s4 = inlined_call_operand.vmem [shape: f32[1,32], index: 4, kind: input, shape index: {}]
  %s5 = inlined_call_operand.vmem [shape: f32[1,32], index: 5, kind: input, shape index: {}]
  %s6 = inlined_call_operand.<no memory space> [shape: f32[1], index: 6, kind: input, shape index: {}]
  %s7 = inlined_call_operand.hbm [shape: f32[1,300], index: 7, kind: output, shape index: {}]
  %s8 = sld [smem:[#allocation0]]
  $region61: #{tpu_custom_call.1} parent=0
    _
  %s10 = ssub.s32 1, %s8
  %s11 = scalar_select 0, %s10, %s8
  %12 = sst [smem:[#allocation2]] %s6
  $region1: #{tpu_custom_call.1} parent=0
    #allocation3 [shape = 'u8[2048]{0}', space=vmem, size = 0x800, scoped, tag = 'output window, operand 0']
    #allocation4 [shape = 's32[2]{0}', space=sflag, size = 0x8, scoped, tag = 'scoped memory for tpu_custom_call.1']
    %13 = vsyncpa [#allocation4], 0
    %s14 = scalar_lea.sflag [#allocation4], 1
    %15 = vsyncpa %s14, 0
    loop: start=0, step=1, limit=4
    $region2: #{tpu_custom_call.1} parent=1 // loop_pre_header
      _
    $region3: #{tpu_custom_call.1} parent=1 // loop_header
      %s17 = sphi 0, %s21
      %p18 = scmp.ge.s32.totalorder %s17, 4
      %s27 = sphi 0, %s29
      %s30 = sphi 0, %s27
      %s31 = sphi 0, %s30
      %s47 = sphi 0, %s31
      %s51 = sphi 0, %s51
      %s53 = sphi 0, %s51
      %s54 = sphi 0, %s53
      %s68 = sphi 0, %s54
      %s72 = sphi 0, %s72
      %s74 = sphi 0, %s72
      %s75 = sphi 0, %s74
      %s89 = sphi 0, %s75
      %s93 = sphi 0, %s93
      %s95 = sphi 0, %s93
      %s96 = sphi 0, %s95
      %s110 = sphi 0, %s96
      %s114 = sphi 0, %s114
      %s116 = sphi 0, %s114
      %s117 = sphi 0, %s116
      %s131 = sphi 0, %s117
      %s135 = sphi 0, %s135
      %s137 = sphi 0, %s135
      %s138 = sphi 0, %s137
      %s152 = sphi 0, %s138
      %s156 = sphi 0, %s156
      %s158 = sphi 0, %s156
      %s159 = sphi 0, %s158
      %s173 = sphi 0, %s159
      %s179 = sphi 0, %s181
      %s182 = sphi 0, %s179
      %s183 = sphi 0, %s182
      %s199 = sphi 0, %s183
    $region4: #{tpu_custom_call.1} parent=1 // loop_header_branch
      %20 = sbr.rel (%p18) target = $region8
    $region5: #{tpu_custom_call.1} parent=1 // loop_body
      %s22 = ssub.s32 %s17, 1
      %s23 = ssub.s32 %s17, 2
      %s24 = sadd.s32 %s17, 1
      %s25 = ssub.s32 %s17, %s24
      %p26 = scmp.eq.s32.totalorder %s25, 0
      %s28 = sadd.s32 %s27, 1
      %s29 = scalar_select %p26, %s27, %s28
      %p32 = pneg %p26
      %p33 = scmp.eq.s32.totalorder %s17, 1
      %p34 = por %p32, %p33
      %p35 = scmp.ne.s32.totalorder %s27, %s30
      %p36 = scmp.eq.s32.totalorder %s17, 0
      %p37 = por %p35, %p36
      %p38 = scmp.ne.s32.totalorder %s27, %s30
      %p39 = scmp.eq.s32.totalorder %s22, 1
      %p40 = por %p38, %p39
      %p41 = scmp.ne.s32.totalorder %s30, %s31
      %p42 = scmp.eq.s32.totalorder %s22, 0
      %p43 = por %p41, %p42
      %p44 = scmp.ne.s32.totalorder %s30, %s31
      %p45 = scmp.eq.s32.totalorder %s23, 1
      %p46 = por %p44, %p45
      %p48 = scmp.ne.s32.totalorder %s31, %s47
      %p49 = scmp.eq.s32.totalorder %s23, 0
      %p50 = por %p48, %p49
      %s52 = sadd.s32 %s51, 1
      %p55 = scmp.eq.s32.totalorder %s17, 1
      %p56 = scmp.ne.s32.totalorder %s51, %s53
      %p57 = scmp.eq.s32.totalorder %s17, 0
      %p58 = por %p56, %p57
      %p59 = scmp.ne.s32.totalorder %s51, %s53
      %p60 = scmp.eq.s32.totalorder %s22, 1
      %p61 = por %p59, %p60
      %p62 = scmp.ne.s32.totalorder %s53, %s54
      %p63 = scmp.eq.s32.totalorder %s22, 0
      %p64 = por %p62, %p63
      %p65 = scmp.ne.s32.totalorder %s53, %s54
      %p66 = scmp.eq.s32.totalorder %s23, 1
      %p67 = por %p65, %p66
      %p69 = scmp.ne.s32.totalorder %s54, %s68
      %p70 = scmp.eq.s32.totalorder %s23, 0
      %p71 = por %p69, %p70
      %s73 = sadd.s32 %s72, 1
      %p76 = scmp.eq.s32.totalorder %s17, 1
      %p77 = scmp.ne.s32.totalorder %s72, %s74
      %p78 = scmp.eq.s32.totalorder %s17, 0
      %p79 = por %p77, %p78
      %p80 = scmp.ne.s32.totalorder %s72, %s74
      %p81 = scmp.eq.s32.totalorder %s22, 1
      %p82 = por %p80, %p81
      %p83 = scmp.ne.s32.totalorder %s74, %s75
      %p84 = scmp.eq.s32.totalorder %s22, 0
      %p85 = por %p83, %p84
      %p86 = scmp.ne.s32.totalorder %s74, %s75
      %p87 = scmp.eq.s32.totalorder %s23, 1
      %p88 = por %p86, %p87
      %p90 = scmp.ne.s32.totalorder %s75, %s89
      %p91 = scmp.eq.s32.totalorder %s23, 0
      %p92 = por %p90, %p91
      %s94 = sadd.s32 %s93, 1
      %p97 = scmp.eq.s32.totalorder %s17, 1
      %p98 = scmp.ne.s32.totalorder %s93, %s95
      %p99 = scmp.eq.s32.totalorder %s17, 0
      %p100 = por %p98, %p99
      %p101 = scmp.ne.s32.totalorder %s93, %s95
      %p102 = scmp.eq.s32.totalorder %s22, 1
      %p103 = por %p101, %p102
      %p104 = scmp.ne.s32.totalorder %s95, %s96
      %p105 = scmp.eq.s32.totalorder %s22, 0
      %p106 = por %p104, %p105
      %p107 = scmp.ne.s32.totalorder %s95, %s96
      %p108 = scmp.eq.s32.totalorder %s23, 1
      %p109 = por %p107, %p108
      %p111 = scmp.ne.s32.totalorder %s96, %s110
      %p112 = scmp.eq.s32.totalorder %s23, 0
      %p113 = por %p111, %p112
      %s115 = sadd.s32 %s114, 1
      %p118 = scmp.eq.s32.totalorder %s17, 1
      %p119 = scmp.ne.s32.totalorder %s114, %s116
      %p120 = scmp.eq.s32.totalorder %s17, 0
      %p121 = por %p119, %p120
      %p122 = scmp.ne.s32.totalorder %s114, %s116
      %p123 = scmp.eq.s32.totalorder %s22, 1
      %p124 = por %p122, %p123
      %p125 = scmp.ne.s32.totalorder %s116, %s117
      %p126 = scmp.eq.s32.totalorder %s22, 0
      %p127 = por %p125, %p126
      %p128 = scmp.ne.s32.totalorder %s116, %s117
      %p129 = scmp.eq.s32.totalorder %s23, 1
      %p130 = por %p128, %p129
      %p132 = scmp.ne.s32.totalorder %s117, %s131
      %p133 = scmp.eq.s32.totalorder %s23, 0
      %p134 = por %p132, %p133
      %s136 = sadd.s32 %s135, 1
      %p139 = scmp.eq.s32.totalorder %s17, 1
      %p140 = scmp.ne.s32.totalorder %s135, %s137
      %p141 = scmp.eq.s32.totalorder %s17, 0
      %p142 = por %p140, %p141
      %p143 = scmp.ne.s32.totalorder %s135, %s137
      %p144 = scmp.eq.s32.totalorder %s22, 1
      %p145 = por %p143, %p144
      %p146 = scmp.ne.s32.totalorder %s137, %s138
      %p147 = scmp.eq.s32.totalorder %s22, 0
      %p148 = por %p146, %p147
      %p149 = scmp.ne.s32.totalorder %s137, %s138
      %p150 = scmp.eq.s32.totalorder %s23, 1
      %p151 = por %p149, %p150
      %p153 = scmp.ne.s32.totalorder %s138, %s152
      %p154 = scmp.eq.s32.totalorder %s23, 0
      %p155 = por %p153, %p154
      %s157 = sadd.s32 %s156, 1
      %p160 = scmp.eq.s32.totalorder %s17, 1
      %p161 = scmp.ne.s32.totalorder %s156, %s158
      %p162 = scmp.eq.s32.totalorder %s17, 0
      %p163 = por %p161, %p162
      %p164 = scmp.ne.s32.totalorder %s156, %s158
      %p165 = scmp.eq.s32.totalorder %s22, 1
      %p166 = por %p164, %p165
      %p167 = scmp.ne.s32.totalorder %s158, %s159
      %p168 = scmp.eq.s32.totalorder %s22, 0
      %p169 = por %p167, %p168
      %p170 = scmp.ne.s32.totalorder %s158, %s159
      %p171 = scmp.eq.s32.totalorder %s23, 1
      %p172 = por %p170, %p171
      %p174 = scmp.ne.s32.totalorder %s159, %s173
      %p175 = scmp.eq.s32.totalorder %s23, 0
      %p176 = por %p174, %p175
      %s177 = ssub.s32 %s17, %s24
      %p178 = scmp.eq.s32.totalorder %s177, 0
      %s180 = sadd.s32 %s179, 1
      %s181 = scalar_select %p178, %s179, %s180
      %p184 = pneg %p178
      %p185 = scmp.eq.s32.totalorder %s17, 1
      %p186 = por %p184, %p185
      %p187 = scmp.ne.s32.totalorder %s179, %s182
      %p188 = scmp.eq.s32.totalorder %s17, 0
      %p189 = por %p187, %p188
      %p190 = scmp.ne.s32.totalorder %s179, %s182
      %p191 = scmp.eq.s32.totalorder %s22, 1
      %p192 = por %p190, %p191
      %p193 = scmp.ne.s32.totalorder %s182, %s183
      %p194 = scmp.eq.s32.totalorder %s22, 0
      %p195 = por %p193, %p194
      %p196 = scmp.ne.s32.totalorder %s182, %s183
      %p197 = scmp.eq.s32.totalorder %s23, 1
      %p198 = por %p196, %p197
      %p200 = scmp.ne.s32.totalorder %s183, %s199
      %p201 = scmp.eq.s32.totalorder %s23, 0
      %p202 = por %p200, %p201
      %p203 = scmp.le.s32.totalorder 1, %s17
      %p204 = scmp.lt.s32.totalorder %s17, 3
      %p205 = pnand %p203, %p204
      %p206 = pneg %p205
      // Predicated region
      $region9: #{tpu_custom_call.1} parent=5 // pred_check
        _
      $region10: #{tpu_custom_call.1} parent=5 // pred_check_branch
        %208 = sbr.rel (%p205) target = $region12
      $region11: #{tpu_custom_call.1} parent=5 // pred_region
        %s209 = ssub.s32 %s17, 1
        // Predicated region
        $region13: #{tpu_custom_call.1} parent=11 // pred_check
          %p210 = pneg %p64
        $region14: #{tpu_custom_call.1} parent=11 // pred_check_branch
          %212 = sbr.rel (%p210) target = $region16
        $region15: #{tpu_custom_call.1} parent=11 // pred_region
          _
        $region16: #{tpu_custom_call.1} parent=11 // pred_fallthru
          _
        // Predicated region
        $region17: #{tpu_custom_call.1} parent=11 // pred_check
          %p213 = pneg %p85
        $region18: #{tpu_custom_call.1} parent=11 // pred_check_branch
          %215 = sbr.rel (%p213) target = $region20
        $region19: #{tpu_custom_call.1} parent=11 // pred_region
          _
        $region20: #{tpu_custom_call.1} parent=11 // pred_fallthru
          _
        // Predicated region
        $region21: #{tpu_custom_call.1} parent=11 // pred_check
          %p216 = pneg %p106
        $region22: #{tpu_custom_call.1} parent=11 // pred_check_branch
          %218 = sbr.rel (%p216) target = $region24
        $region23: #{tpu_custom_call.1} parent=11 // pred_region
          _
        $region24: #{tpu_custom_call.1} parent=11 // pred_fallthru
          _
        // Predicated region
        $region25: #{tpu_custom_call.1} parent=11 // pred_check
          %p219 = pneg %p127
        $region26: #{tpu_custom_call.1} parent=11 // pred_check_branch
          %221 = sbr.rel (%p219) target = $region28
        $region27: #{tpu_custom_call.1} parent=11 // pred_region
          _
        $region28: #{tpu_custom_call.1} parent=11 // pred_fallthru
          _
        // Predicated region
        $region29: #{tpu_custom_call.1} parent=11 // pred_check
          %p222 = pneg %p148
        $region30: #{tpu_custom_call.1} parent=11 // pred_check_branch
          %224 = sbr.rel (%p222) target = $region32
        $region31: #{tpu_custom_call.1} parent=11 // pred_region
          _
        $region32: #{tpu_custom_call.1} parent=11 // pred_fallthru
          _
        // Predicated region
        $region33: #{tpu_custom_call.1} parent=11 // pred_check
          %p225 = pneg %p169
        $region34: #{tpu_custom_call.1} parent=11 // pred_check_branch
          %227 = sbr.rel (%p225) target = $region36
        $region35: #{tpu_custom_call.1} parent=11 // pred_region
          _
        $region36: #{tpu_custom_call.1} parent=11 // pred_fallthru
          _
      $region12: #{tpu_custom_call.1} parent=5 // pred_fallthru
        _
      %p228 = scmp.lt.s32.totalorder %s17, 2
      // Predicated region
      $region37: #{tpu_custom_call.1} parent=5 // pred_check
        %p229 = pneg %p228
      $region38: #{tpu_custom_call.1} parent=5 // pred_check_branch
        %231 = sbr.rel (%p229) target = $region40
      $region39: #{tpu_custom_call.1} parent=5 // pred_region
        // Predicated region
        $region41: #{tpu_custom_call.1} parent=39 // pred_check
          %p232 = pneg %p37
        $region42: #{tpu_custom_call.1} parent=39 // pred_check_branch
          %234 = sbr.rel (%p232) target = $region44
        $region43: #{tpu_custom_call.1} parent=39 // pred_region
          %s235 = smul.u32 32, %s17
          %s236 = ssub.s32 38, %s235
          %p237 = scmp.lt.s32.totalorder %s236, 32
          %s238 = scalar_select %p237, %s236, 32
          %s239 = smul.u32 64, %s238
          %p240 = scmp.lt.s32.totalorder %s235, 37
          %s241 = scalar_select %p240, %s235, 37
          %s242 = smul.addr %s241, 4
          %s243 = scalar_lea.vmem %s0, %s242
          %s244 = smul.u32 32, %s17
          %s245 = ssub.s32 38, %s244
          %p246 = scmp.lt.s32.totalorder %s245, 32
          %s247 = scalar_select %p246, %s245, 32
          %s248 = smul.u32 64, %s247
        $region44: #{tpu_custom_call.1} parent=39 // pred_fallthru
          _
      $region40: #{tpu_custom_call.1} parent=5 // pred_fallthru
        _
      %p249 = scmp.le.s32.totalorder 1, %s17
      %p250 = scmp.lt.s32.totalorder %s17, 3
      %p251 = pnand %p249, %p250
      %p252 = pneg %p251
      // Predicated region
      $region45: #{tpu_custom_call.1} parent=5 // pred_check
        _
      $region46: #{tpu_custom_call.1} parent=5 // pred_check_branch
        %254 = sbr.rel (%p251) target = $region48
      $region47: #{tpu_custom_call.1} parent=5 // pred_region
        %s255 = ssub.s32 %s17, 1
        %s256 = smul.u32 32, %s22
        %s257 = ssub.s32 38, %s256
        %p258 = scmp.lt.s32.totalorder %s257, 32
        %s259 = scalar_select %p258, %s257, 32
        %s260 = smul.u32 64, %s259
        %p261 = scmp.lt.s32.totalorder %s256, 37
        %s262 = scalar_select %p261, %s256, 37
        %s263 = smul.addr %s262, 4
        %s264 = scalar_lea.vmem %s0, %s263
        %p265 = pneg %p43
        %p266 = pneg %p40
        %p267 = pneg %p64
        %p268 = pneg %p61
        %p269 = pneg %p85
        %p270 = pneg %p82
        %p271 = pneg %p106
        %p272 = pneg %p103
        %p273 = pneg %p127
        %p274 = pneg %p124
        %p275 = pneg %p148
        %p276 = pneg %p145
        %p277 = pneg %p169
        %p278 = pneg %p166
        %p279 = pneg %p195
        %p280 = pneg %p192
        %s281 = sand.u32 %s182, 1
        %s282 = scalar_lea.sflag [#allocation4], %s281
        %s283 = sand.u32 %s182, 1
        %s284 = smul.addr %s283, 2
        %s285 = scalar_lea.vmem [#allocation3], %s284
        %s286 = smul.u32 32, %s22
        %s287 = ssub.s32 38, %s286
        %p288 = scmp.lt.s32.totalorder %s287, 32
        %s289 = scalar_select %p288, %s287, 32
        %s290 = smul.u32 64, %s289
        %p291 = scmp.lt.s32.totalorder %s286, 37
        %s292 = scalar_select %p291, %s286, 37
        %s293 = smul.addr %s292, 4
        %s294 = scalar_lea.vmem %s0, %s293
        %s295 = smul.u32 32, %s22
        %s296 = ssub.s32 38, %s295
        %p297 = scmp.lt.s32.totalorder %s296, 32
        %s298 = scalar_select %p297, %s296, 32
        %s299 = smul.u32 64, %s298
        %s300 = smul.u32 2, %s22
        %s301 = ssub.s32 3, %s300
        %p302 = scmp.lt.s32.totalorder %s301, 2
        %s303 = scalar_select %p302, %s301, 2
        %s304 = smul.u32 16, %s303
        %v306 = vld [vmem:[%s1] sm:$0xf]
        %v307 = vld [vmem:[%s1 + $0x4] sm:$0xf]
        %v308 = vld [vmem:[%s1 + $0x8] sm:$0xf]
        %v309 = vld [vmem:[%s1 + $0xc] sm:$0xf]
        %v310 = vld [vmem:[%s2] sm:$0x1]
        %v311 = vld [vmem:[%s3] sm:$0xf]
        %v312 = vld [vmem:[%s3 + $0x4] sm:$0xf]
        %v313 = vld [vmem:[%s3 + $0x8] sm:$0xf]
        %v314 = vld [vmem:[%s3 + $0xc] sm:$0xf]
        %v315 = vld [vmem:[%s3 + $0x10] sm:$0xf]
        %v316 = vld [vmem:[%s3 + $0x14] sm:$0xf]
        %v317 = vld [vmem:[%s3 + $0x18] sm:$0xf]
        %v318 = vld [vmem:[%s3 + $0x1c] sm:$0xf]
        %v319 = vld [vmem:[%s4] sm:$0x1]
        %v320 = vld [vmem:[%s5] sm:$0x1]
        %s321 = sld [smem:[#allocation2]]
        %v322 = vld [vmem:[%s294] sm:$0xf]
        %v323 = vld [vmem:[%s294 + $0x4] sm:$0xf]
        %v324 = vld [vmem:[%s294 + $0x8] sm:$0xf]
        %v325 = vld [vmem:[%s294 + $0xc] sm:$0xf]
        %v326 = vld [vmem:[%s294 + $0x10] sm:$0xf]
        %v327 = vld [vmem:[%s294 + $0x14] sm:$0xf]
        %v328 = vld [vmem:[%s294 + $0x18] sm:$0xf]
        %v329 = vld [vmem:[%s294 + $0x1c] sm:$0xf]
        %v330 = vld [vmem:[%s294 + $0x20] sm:$0xf]
        %v331 = vld [vmem:[%s294 + $0x24] sm:$0xf]
        %v332 = vld [vmem:[%s294 + $0x28] sm:$0xf]
        %v333 = vld [vmem:[%s294 + $0x2c] sm:$0xf]
        %v334 = vld [vmem:[%s294 + $0x30] sm:$0xf]
        %v335 = vld [vmem:[%s294 + $0x34] sm:$0xf]
        %v336 = vld [vmem:[%s294 + $0x38] sm:$0xf]
        %v337 = vld [vmem:[%s294 + $0x3c] sm:$0xf]
        %v338 = vld [vmem:[%s294 + $0x40] sm:$0xf]
        %v339 = vld [vmem:[%s294 + $0x44] sm:$0xf]
        %v340 = vld [vmem:[%s294 + $0x48] sm:$0xf]
        %v341 = vld [vmem:[%s294 + $0x4c] sm:$0xf]
        %v342 = vld [vmem:[%s294 + $0x50] sm:$0xf]
        %v343 = vld [vmem:[%s294 + $0x54] sm:$0xf]
        %v344 = vld [vmem:[%s294 + $0x58] sm:$0xf]
        %v345 = vld [vmem:[%s294 + $0x5c] sm:$0xf]
        %v346 = vld [vmem:[%s294 + $0x60] sm:$0xf]
        %v347 = vld [vmem:[%s294 + $0x64] sm:$0xf]
        %v348 = vld [vmem:[%s294 + $0x68] sm:$0xf]
        %v349 = vld [vmem:[%s294 + $0x6c] sm:$0xf]
        %v350 = vld [vmem:[%s294 + $0x70] sm:$0xf]
        %v351 = vld [vmem:[%s294 + $0x74] sm:$0xf]
        %v352 = vld [vmem:[%s294 + $0x78] sm:$0xf]
        %v353 = vld [vmem:[%s294 + $0x7c] sm:$0xf]
        %v355 = vlaneseq
        %v356 = vshrl.u32 %v355, 7
        %v357 = vsub.s32 0, %v356
        %v358 = vrot.slane %v310, %v357
        %v392 = vunpack.c.l.b16 %v322
        %v393 = vunpack.c.l.b16 %v323
        %v394 = vunpack.c.l.b16 %v324
        %v395 = vunpack.c.l.b16 %v325
        %v396 = vunpack.c.l.b16 %v326
        %v397 = vunpack.c.l.b16 %v327
        %v398 = vunpack.c.l.b16 %v328
        %v399 = vunpack.c.l.b16 %v329
        %v400 = vunpack.c.l.b16 %v330
        %v401 = vunpack.c.l.b16 %v331
        %v402 = vunpack.c.l.b16 %v332
        %v403 = vunpack.c.l.b16 %v333
        %v404 = vunpack.c.l.b16 %v334
        %v405 = vunpack.c.l.b16 %v335
        %v406 = vunpack.c.l.b16 %v336
        %v407 = vunpack.c.l.b16 %v337
        %v408 = vunpack.c.l.b16 %v338
        %v409 = vunpack.c.l.b16 %v339
        %v410 = vunpack.c.l.b16 %v340
        %v411 = vunpack.c.l.b16 %v341
        %v412 = vunpack.c.l.b16 %v342
        %v413 = vunpack.c.l.b16 %v343
        %v414 = vunpack.c.l.b16 %v344
        %v415 = vunpack.c.l.b16 %v345
        %v416 = vunpack.c.l.b16 %v346
        %v417 = vunpack.c.l.b16 %v347
        %v418 = vunpack.c.l.b16 %v348
        %v419 = vunpack.c.l.b16 %v349
        %v420 = vunpack.c.l.b16 %v350
        %v421 = vunpack.c.l.b16 %v351
        %v422 = vunpack.c.l.b16 %v352
        %v423 = vunpack.c.l.b16 %v353
        %v424 = vpack.c.b16 %v393, %v392
        %v425 = vpack.c.b16 %v395, %v394
        %v426 = vpack.c.b16 %v397, %v396
        %v427 = vpack.c.b16 %v399, %v398
        %v428 = vpack.c.b16 %v401, %v400
        %v429 = vpack.c.b16 %v403, %v402
        %v430 = vpack.c.b16 %v405, %v404
        %v431 = vpack.c.b16 %v407, %v406
        %v432 = vpack.c.b16 %v409, %v408
        %v433 = vpack.c.b16 %v411, %v410
        %v434 = vpack.c.b16 %v413, %v412
        %v435 = vpack.c.b16 %v415, %v414
        %v436 = vpack.c.b16 %v417, %v416
        %v437 = vpack.c.b16 %v419, %v418
        %v438 = vpack.c.b16 %v421, %v420
        %v439 = vpack.c.b16 %v423, %v422
        %v444 = vunpack.c.l.b16 %v306
        %v445 = vunpack.c.l.b16 %v307
        %v446 = vunpack.c.l.b16 %v308
        %v447 = vunpack.c.l.b16 %v309
        %v448 = vpack.c.b16 %v445, %v444
        %v449 = vpack.c.b16 %v447, %v446
        %vm452 = vcmask 261120
        %v454 = vsel %vm452, %v424, 0
        %v457 = vsel %vm452, %v425, 0
        %v460 = vsel %vm452, %v426, 0
        %v463 = vsel %vm452, %v427, 0
        %v466 = vsel %vm452, %v428, 0
        %v469 = vsel %vm452, %v429, 0
        %v472 = vsel %vm452, %v430, 0
        %v475 = vsel %vm452, %v431, 0
        %v478 = vsel %vm452, %v432, 0
        %v481 = vsel %vm452, %v433, 0
        %v484 = vsel %vm452, %v434, 0
        %v487 = vsel %vm452, %v435, 0
        %v490 = vsel %vm452, %v436, 0
        %v493 = vsel %vm452, %v437, 0
        %v496 = vsel %vm452, %v438, 0
        %v499 = vsel %vm452, %v439, 0
        %501 = vmatprep.subr.bf16.mxu0 0
        %502 = vmatpush1.bf16.msra.mxu0 %v448
        %503 = vmatprep.subr.bf16.mxu0 0
        %504 = vmatpush1.bf16.msra.mxu0 %v449
        %505 = vmatprep.subr.bf16.mxu0 0
        %506 = vmatpush1.bf16.msra.mxu0 0
        %507 = vmatprep.subr.bf16.mxu0 0
        %508 = vmatpush1.bf16.msra.mxu0 0
        %509 = vmatprep.subr.bf16.mxu0 0
        %510 = vmatpush1.bf16.msra.mxu0 0
        %511 = vmatprep.subr.bf16.mxu0 0
        %512 = vmatpush1.bf16.msra.mxu0 0
        %513 = vmatprep.subr.bf16.mxu0 0
        %514 = vmatpush1.bf16.msra.mxu0 0
        %515 = vmatprep.subr.bf16.mxu0 0
        %516 = vmatpush1.bf16.msra.mxu0 0
        %517 = vmatprep.subr.bf16.mxu0 0
        %518 = vmatpush1.bf16.msra.mxu0 0
        %519 = vmatprep.subr.bf16.mxu0 0
        %520 = vmatpush1.bf16.msra.mxu0 0
        %521 = vmatprep.subr.bf16.mxu0 0
        %522 = vmatpush1.bf16.msra.mxu0 0
        %523 = vmatprep.subr.bf16.mxu0 0
        %524 = vmatpush1.bf16.msra.mxu0 0
        %525 = vmatprep.subr.bf16.mxu0 0
        %526 = vmatpush1.bf16.msra.mxu0 0
        %527 = vmatprep.subr.bf16.mxu0 0
        %528 = vmatpush1.bf16.msra.mxu0 0
        %529 = vmatprep.subr.bf16.mxu0 0
        %530 = vmatpush1.bf16.msra.mxu0 0
        %531 = vmatprep.subr.bf16.mxu0 0
        %532 = vmatpush1.bf16.msra.mxu0 0
        %533 = vmatprep.mubr.bf16.mxu0 0
        %534 = vmatmul.mubr.bf16.gmra.mrb[0].mxu0 %v454
        %v535 = vpop.f32.mrb[0].mxu0
        %v536 = vadd.f32 %v358, %v535
        %v537 = vpop.f32.mrb[0].mxu0
        %v538 = vpop.f32.mrb[0].mxu0
        %v539 = vadd.f32 %v358, %v538
        %v540 = vpop.f32.mrb[0].mxu0
        %541 = vmatprep.mubr.bf16.mxu0 0
        %542 = vmatmul.mubr.bf16.gmra.mrb[0].mxu0 %v457
        %v543 = vpop.f32.mrb[0].mxu0
        %v544 = vadd.f32 %v358, %v543
        %v545 = vpop.f32.mrb[0].mxu0
        %v546 = vpop.f32.mrb[0].mxu0
        %v547 = vadd.f32 %v358, %v546
        %v548 = vpop.f32.mrb[0].mxu0
        %549 = vmatprep.mubr.bf16.mxu0 0
        %550 = vmatmul.mubr.bf16.gmra.mrb[0].mxu0 %v460
        %v551 = vpop.f32.mrb[0].mxu0
        %v552 = vadd.f32 %v358, %v551
        %v553 = vpop.f32.mrb[0].mxu0
        %v554 = vpop.f32.mrb[0].mxu0
        %v555 = vadd.f32 %v358, %v554
        %v556 = vpop.f32.mrb[0].mxu0
        %557 = vmatprep.mubr.bf16.mxu0 0
        %558 = vmatmul.mubr.bf16.gmra.mrb[0].mxu0 %v463
        %v559 = vpop.f32.mrb[0].mxu0
        %v560 = vadd.f32 %v358, %v559
        %v561 = vpop.f32.mrb[0].mxu0
        %v562 = vpop.f32.mrb[0].mxu0
        %v563 = vadd.f32 %v358, %v562
        %v564 = vpop.f32.mrb[0].mxu0
        %565 = vmatprep.mubr.bf16.mxu0 0
        %566 = vmatmul.mubr.bf16.gmra.mrb[0].mxu0 %v466
        %v567 = vpop.f32.mrb[0].mxu0
        %v568 = vadd.f32 %v358, %v567
        %v569 = vpop.f32.mrb[0].mxu0
        %v570 = vpop.f32.mrb[0].mxu0
        %v571 = vadd.f32 %v358, %v570
        %v572 = vpop.f32.mrb[0].mxu0
        %573 = vmatprep.mubr.bf16.mxu0 0
        %574 = vmatmul.mubr.bf16.gmra.mrb[0].mxu0 %v469
        %v575 = vpop.f32.mrb[0].mxu0
        %v576 = vadd.f32 %v358, %v575
        %v577 = vpop.f32.mrb[0].mxu0
        %v578 = vpop.f32.mrb[0].mxu0
        %v579 = vadd.f32 %v358, %v578
        %v580 = vpop.f32.mrb[0].mxu0
        %581 = vmatprep.mubr.bf16.mxu0 0
        %582 = vmatmul.mubr.bf16.gmra.mrb[0].mxu0 %v472
        %v583 = vpop.f32.mrb[0].mxu0
        %v584 = vadd.f32 %v358, %v583
        %v585 = vpop.f32.mrb[0].mxu0
        %v586 = vpop.f32.mrb[0].mxu0
        %v587 = vadd.f32 %v358, %v586
        %v588 = vpop.f32.mrb[0].mxu0
        %589 = vmatprep.mubr.bf16.mxu0 0
        %590 = vmatmul.mubr.bf16.gmra.mrb[0].mxu0 %v475
        %v591 = vpop.f32.mrb[0].mxu0
        %v592 = vadd.f32 %v358, %v591
        %v593 = vpop.f32.mrb[0].mxu0
        %v594 = vpop.f32.mrb[0].mxu0
        %v595 = vadd.f32 %v358, %v594
        %v596 = vpop.f32.mrb[0].mxu0
        %597 = vmatprep.mubr.bf16.mxu0 0
        %598 = vmatmul.mubr.bf16.gmra.mrb[0].mxu0 %v478
        %v599 = vpop.f32.mrb[0].mxu0
        %v600 = vadd.f32 %v358, %v599
        %v601 = vpop.f32.mrb[0].mxu0
        %v602 = vpop.f32.mrb[0].mxu0
        %v603 = vadd.f32 %v358, %v602
        %v604 = vpop.f32.mrb[0].mxu0
        %605 = vmatprep.mubr.bf16.mxu0 0
        %606 = vmatmul.mubr.bf16.gmra.mrb[0].mxu0 %v481
        %v607 = vpop.f32.mrb[0].mxu0
        %v608 = vadd.f32 %v358, %v607
        %v609 = vpop.f32.mrb[0].mxu0
        %v610 = vpop.f32.mrb[0].mxu0
        %v611 = vadd.f32 %v358, %v610
        %v612 = vpop.f32.mrb[0].mxu0
        %613 = vmatprep.mubr.bf16.mxu0 0
        %614 = vmatmul.mubr.bf16.gmra.mrb[0].mxu0 %v484
        %v615 = vpop.f32.mrb[0].mxu0
        %v616 = vadd.f32 %v358, %v615
        %v617 = vpop.f32.mrb[0].mxu0
        %v618 = vpop.f32.mrb[0].mxu0
        %v619 = vadd.f32 %v358, %v618
        %v620 = vpop.f32.mrb[0].mxu0
        %621 = vmatprep.mubr.bf16.mxu0 0
        %622 = vmatmul.mubr.bf16.gmra.mrb[0].mxu0 %v487
        %v623 = vpop.f32.mrb[0].mxu0
        %v624 = vadd.f32 %v358, %v623
        %v625 = vpop.f32.mrb[0].mxu0
        %v626 = vpop.f32.mrb[0].mxu0
        %v627 = vadd.f32 %v358, %v626
        %v628 = vpop.f32.mrb[0].mxu0
        %629 = vmatprep.mubr.bf16.mxu0 0
        %630 = vmatmul.mubr.bf16.gmra.mrb[0].mxu0 %v490
        %v631 = vpop.f32.mrb[0].mxu0
        %v632 = vadd.f32 %v358, %v631
        %v633 = vpop.f32.mrb[0].mxu0
        %v634 = vpop.f32.mrb[0].mxu0
        %v635 = vadd.f32 %v358, %v634
        %v636 = vpop.f32.mrb[0].mxu0
        %637 = vmatprep.mubr.bf16.mxu0 0
        %638 = vmatmul.mubr.bf16.gmra.mrb[0].mxu0 %v493
        %v639 = vpop.f32.mrb[0].mxu0
        %v640 = vadd.f32 %v358, %v639
        %v641 = vpop.f32.mrb[0].mxu0
        %v642 = vpop.f32.mrb[0].mxu0
        %v643 = vadd.f32 %v358, %v642
        %v644 = vpop.f32.mrb[0].mxu0
        %645 = vmatprep.mubr.bf16.mxu0 0
        %646 = vmatmul.mubr.bf16.gmra.mrb[0].mxu0 %v496
        %v647 = vpop.f32.mrb[0].mxu0
        %v648 = vadd.f32 %v358, %v647
        %v649 = vpop.f32.mrb[0].mxu0
        %v650 = vpop.f32.mrb[0].mxu0
        %v651 = vadd.f32 %v358, %v650
        %v652 = vpop.f32.mrb[0].mxu0
        %653 = vmatprep.mubr.bf16.mxu0 0
        %654 = vmatmul.mubr.bf16.gmra.mrb[0].mxu0 %v499
        %v655 = vpop.f32.mrb[0].mxu0
        %v656 = vadd.f32 %v358, %v655
        %v657 = vpop.f32.mrb[0].mxu0
        %v658 = vpop.f32.mrb[0].mxu0
        %v659 = vadd.f32 %v358, %v658
        %v660 = vpop.f32.mrb[0].mxu0
        %661 = vdwg.mxu0
        %v662 = vmax.f32 %v536, 0.0
        %v663 = vmax.f32 %v539, 0.0
        %v664 = vmax.f32 %v544, 0.0
        %v665 = vmax.f32 %v547, 0.0
        %v666 = vmax.f32 %v552, 0.0
        %v667 = vmax.f32 %v555, 0.0
        %v668 = vmax.f32 %v560, 0.0
        %v669 = vmax.f32 %v563, 0.0
        %v670 = vmax.f32 %v568, 0.0
        %v671 = vmax.f32 %v571, 0.0
        %v672 = vmax.f32 %v576, 0.0
        %v673 = vmax.f32 %v579, 0.0
        %v674 = vmax.f32 %v584, 0.0
        %v675 = vmax.f32 %v587, 0.0
        %v676 = vmax.f32 %v592, 0.0
        %v677 = vmax.f32 %v595, 0.0
        %v678 = vmax.f32 %v600, 0.0
        %v679 = vmax.f32 %v603, 0.0
        %v680 = vmax.f32 %v608, 0.0
        %v681 = vmax.f32 %v611, 0.0
        %v682 = vmax.f32 %v616, 0.0
        %v683 = vmax.f32 %v619, 0.0
        %v684 = vmax.f32 %v624, 0.0
        %v685 = vmax.f32 %v627, 0.0
        %v686 = vmax.f32 %v632, 0.0
        %v687 = vmax.f32 %v635, 0.0
        %v688 = vmax.f32 %v640, 0.0
        %v689 = vmax.f32 %v643, 0.0
        %v690 = vmax.f32 %v648, 0.0
        %v691 = vmax.f32 %v651, 0.0
        %v692 = vmax.f32 %v656, 0.0
        %v693 = vmax.f32 %v659, 0.0
        %v694 = vpack.c.bf16 %v663, %v662
        %v695 = vpack.c.bf16 %v665, %v664
        %v696 = vpack.c.bf16 %v667, %v666
        %v697 = vpack.c.bf16 %v669, %v668
        %v698 = vpack.c.bf16 %v671, %v670
        %v699 = vpack.c.bf16 %v673, %v672
        %v700 = vpack.c.bf16 %v675, %v674
        %v701 = vpack.c.bf16 %v677, %v676
        %v702 = vpack.c.bf16 %v679, %v678
        %v703 = vpack.c.bf16 %v681, %v680
        %v704 = vpack.c.bf16 %v683, %v682
        %v705 = vpack.c.bf16 %v685, %v684
        %v706 = vpack.c.bf16 %v687, %v686
        %v707 = vpack.c.bf16 %v689, %v688
        %v708 = vpack.c.bf16 %v691, %v690
        %v709 = vpack.c.bf16 %v693, %v692
        %v711 = vlaneseq
        %v712 = vshrl.u32 %v711, 7
        %v713 = vsub.s32 0, %v712
        %v714 = vrot.slane %v319, %v713
        %v724 = vunpack.c.l.b16 %v311
        %v725 = vunpack.c.l.b16 %v312
        %v726 = vunpack.c.l.b16 %v313
        %v727 = vunpack.c.l.b16 %v314
        %v728 = vunpack.c.l.b16 %v315
        %v729 = vunpack.c.l.b16 %v316
        %v730 = vunpack.c.l.b16 %v317
        %v731 = vunpack.c.l.b16 %v318
        %v732 = vpack.c.b16 %v725, %v724
        %v733 = vpack.c.b16 %v727, %v726
        %v734 = vpack.c.b16 %v729, %v728
        %v735 = vpack.c.b16 %v731, %v730
        %vm740 = vcmask 523264
        %v742 = vsel %vm740, %v694, 0
        %v745 = vsel %vm740, %v695, 0
        %v748 = vsel %vm740, %v696, 0
        %v751 = vsel %vm740, %v697, 0
        %v754 = vsel %vm740, %v698, 0
        %v757 = vsel %vm740, %v699, 0
        %v760 = vsel %vm740, %v700, 0
        %v763 = vsel %vm740, %v701, 0
        %v766 = vsel %vm740, %v702, 0
        %v769 = vsel %vm740, %v703, 0
        %v772 = vsel %vm740, %v704, 0
        %v775 = vsel %vm740, %v705, 0
        %v778 = vsel %vm740, %v706, 0
        %v781 = vsel %vm740, %v707, 0
        %v784 = vsel %vm740, %v708, 0
        %v787 = vsel %vm740, %v709, 0
        %789 = vmatprep.subr.bf16.mxu0 0
        %790 = vmatpush1.bf16.msra.mxu0 %v732
        %791 = vmatprep.subr.bf16.mxu0 0
        %792 = vmatpush1.bf16.msra.mxu0 %v733
        %793 = vmatprep.subr.bf16.mxu0 0
        %794 = vmatpush1.bf16.msra.mxu0 %v734
        %795 = vmatprep.subr.bf16.mxu0 0
        %796 = vmatpush1.bf16.msra.mxu0 %v735
        %797 = vmatprep.subr.bf16.mxu0 0
        %798 = vmatpush1.bf16.msra.mxu0 0
        %799 = vmatprep.subr.bf16.mxu0 0
        %800 = vmatpush1.bf16.msra.mxu0 0
        %801 = vmatprep.subr.bf16.mxu0 0
        %802 = vmatpush1.bf16.msra.mxu0 0
        %803 = vmatprep.subr.bf16.mxu0 0
        %804 = vmatpush1.bf16.msra.mxu0 0
        %805 = vmatprep.subr.bf16.mxu0 0
        %806 = vmatpush1.bf16.msra.mxu0 0
        %807 = vmatprep.subr.bf16.mxu0 0
        %808 = vmatpush1.bf16.msra.mxu0 0
        %809 = vmatprep.subr.bf16.mxu0 0
        %810 = vmatpush1.bf16.msra.mxu0 0
        %811 = vmatprep.subr.bf16.mxu0 0
        %812 = vmatpush1.bf16.msra.mxu0 0
        %813 = vmatprep.subr.bf16.mxu0 0
        %814 = vmatpush1.bf16.msra.mxu0 0
        %815 = vmatprep.subr.bf16.mxu0 0
        %816 = vmatpush1.bf16.msra.mxu0 0
        %817 = vmatprep.subr.bf16.mxu0 0
        %818 = vmatpush1.bf16.msra.mxu0 0
        %819 = vmatprep.subr.bf16.mxu0 0
        %820 = vmatpush1.bf16.msra.mxu0 0
        %821 = vmatprep.mubr.bf16.mxu0 0
        %822 = vmatmul.mubr.bf16.gmra.mrb[0].mxu0 %v742
        %v823 = vpop.f32.mrb[0].mxu0
        %v824 = vadd.f32 %v714, %v823
        %v825 = vpop.f32.mrb[0].mxu0
        %v826 = vpop.f32.mrb[0].mxu0
        %v827 = vadd.f32 %v714, %v826
        %v828 = vpop.f32.mrb[0].mxu0
        %829 = vmatprep.mubr.bf16.mxu0 0
        %830 = vmatmul.mubr.bf16.gmra.mrb[0].mxu0 %v745
        %v831 = vpop.f32.mrb[0].mxu0
        %v832 = vadd.f32 %v714, %v831
        %v833 = vpop.f32.mrb[0].mxu0
        %v834 = vpop.f32.mrb[0].mxu0
        %v835 = vadd.f32 %v714, %v834
        %v836 = vpop.f32.mrb[0].mxu0
        %837 = vmatprep.mubr.bf16.mxu0 0
        %838 = vmatmul.mubr.bf16.gmra.mrb[0].mxu0 %v748
        %v839 = vpop.f32.mrb[0].mxu0
        %v840 = vadd.f32 %v714, %v839
        %v841 = vpop.f32.mrb[0].mxu0
        %v842 = vpop.f32.mrb[0].mxu0
        %v843 = vadd.f32 %v714, %v842
        %v844 = vpop.f32.mrb[0].mxu0
        %845 = vmatprep.mubr.bf16.mxu0 0
        %846 = vmatmul.mubr.bf16.gmra.mrb[0].mxu0 %v751
        %v847 = vpop.f32.mrb[0].mxu0
        %v848 = vadd.f32 %v714, %v847
        %v849 = vpop.f32.mrb[0].mxu0
        %v850 = vpop.f32.mrb[0].mxu0
        %v851 = vadd.f32 %v714, %v850
        %v852 = vpop.f32.mrb[0].mxu0
        %853 = vmatprep.mubr.bf16.mxu0 0
        %854 = vmatmul.mubr.bf16.gmra.mrb[0].mxu0 %v754
        %v855 = vpop.f32.mrb[0].mxu0
        %v856 = vadd.f32 %v714, %v855
        %v857 = vpop.f32.mrb[0].mxu0
        %v858 = vpop.f32.mrb[0].mxu0
        %v859 = vadd.f32 %v714, %v858
        %v860 = vpop.f32.mrb[0].mxu0
        %861 = vmatprep.mubr.bf16.mxu0 0
        %862 = vmatmul.mubr.bf16.gmra.mrb[0].mxu0 %v757
        %v863 = vpop.f32.mrb[0].mxu0
        %v864 = vadd.f32 %v714, %v863
        %v865 = vpop.f32.mrb[0].mxu0
        %v866 = vpop.f32.mrb[0].mxu0
        %v867 = vadd.f32 %v714, %v866
        %v868 = vpop.f32.mrb[0].mxu0
        %869 = vmatprep.mubr.bf16.mxu0 0
        %870 = vmatmul.mubr.bf16.gmra.mrb[0].mxu0 %v760
        %v871 = vpop.f32.mrb[0].mxu0
        %v872 = vadd.f32 %v714, %v871
        %v873 = vpop.f32.mrb[0].mxu0
        %v874 = vpop.f32.mrb[0].mxu0
        %v875 = vadd.f32 %v714, %v874
        %v876 = vpop.f32.mrb[0].mxu0
        %877 = vmatprep.mubr.bf16.mxu0 0
        %878 = vmatmul.mubr.bf16.gmra.mrb[0].mxu0 %v763
        %v879 = vpop.f32.mrb[0].mxu0
        %v880 = vadd.f32 %v714, %v879
        %v881 = vpop.f32.mrb[0].mxu0
        %v882 = vpop.f32.mrb[0].mxu0
        %v883 = vadd.f32 %v714, %v882
        %v884 = vpop.f32.mrb[0].mxu0
        %885 = vmatprep.mubr.bf16.mxu0 0
        %886 = vmatmul.mubr.bf16.gmra.mrb[0].mxu0 %v766
        %v887 = vpop.f32.mrb[0].mxu0
        %v888 = vadd.f32 %v714, %v887
        %v889 = vpop.f32.mrb[0].mxu0
        %v890 = vpop.f32.mrb[0].mxu0
        %v891 = vadd.f32 %v714, %v890
        %v892 = vpop.f32.mrb[0].mxu0
        %893 = vmatprep.mubr.bf16.mxu0 0
        %894 = vmatmul.mubr.bf16.gmra.mrb[0].mxu0 %v769
        %v895 = vpop.f32.mrb[0].mxu0
        %v896 = vadd.f32 %v714, %v895
        %v897 = vpop.f32.mrb[0].mxu0
        %v898 = vpop.f32.mrb[0].mxu0
        %v899 = vadd.f32 %v714, %v898
        %v900 = vpop.f32.mrb[0].mxu0
        %901 = vmatprep.mubr.bf16.mxu0 0
        %902 = vmatmul.mubr.bf16.gmra.mrb[0].mxu0 %v772
        %v903 = vpop.f32.mrb[0].mxu0
        %v904 = vadd.f32 %v714, %v903
        %v905 = vpop.f32.mrb[0].mxu0
        %v906 = vpop.f32.mrb[0].mxu0
        %v907 = vadd.f32 %v714, %v906
        %v908 = vpop.f32.mrb[0].mxu0
        %909 = vmatprep.mubr.bf16.mxu0 0
        %910 = vmatmul.mubr.bf16.gmra.mrb[0].mxu0 %v775
        %v911 = vpop.f32.mrb[0].mxu0
        %v912 = vadd.f32 %v714, %v911
        %v913 = vpop.f32.mrb[0].mxu0
        %v914 = vpop.f32.mrb[0].mxu0
        %v915 = vadd.f32 %v714, %v914
        %v916 = vpop.f32.mrb[0].mxu0
        %917 = vmatprep.mubr.bf16.mxu0 0
        %918 = vmatmul.mubr.bf16.gmra.mrb[0].mxu0 %v778
        %v919 = vpop.f32.mrb[0].mxu0
        %v920 = vadd.f32 %v714, %v919
        %v921 = vpop.f32.mrb[0].mxu0
        %v922 = vpop.f32.mrb[0].mxu0
        %v923 = vadd.f32 %v714, %v922
        %v924 = vpop.f32.mrb[0].mxu0
        %925 = vmatprep.mubr.bf16.mxu0 0
        %926 = vmatmul.mubr.bf16.gmra.mrb[0].mxu0 %v781
        %v927 = vpop.f32.mrb[0].mxu0
        %v928 = vadd.f32 %v714, %v927
        %v929 = vpop.f32.mrb[0].mxu0
        %v930 = vpop.f32.mrb[0].mxu0
        %v931 = vadd.f32 %v714, %v930
        %v932 = vpop.f32.mrb[0].mxu0
        %933 = vmatprep.mubr.bf16.mxu0 0
        %934 = vmatmul.mubr.bf16.gmra.mrb[0].mxu0 %v784
        %v935 = vpop.f32.mrb[0].mxu0
        %v936 = vadd.f32 %v714, %v935
        %v937 = vpop.f32.mrb[0].mxu0
        %v938 = vpop.f32.mrb[0].mxu0
        %v939 = vadd.f32 %v714, %v938
        %v940 = vpop.f32.mrb[0].mxu0
        %941 = vmatprep.mubr.bf16.mxu0 0
        %942 = vmatmul.mubr.bf16.gmra.mrb[0].mxu0 %v787
        %v943 = vpop.f32.mrb[0].mxu0
        %v944 = vadd.f32 %v714, %v943
        %v945 = vpop.f32.mrb[0].mxu0
        %v946 = vpop.f32.mrb[0].mxu0
        %v947 = vadd.f32 %v714, %v946
        %v948 = vpop.f32.mrb[0].mxu0
        %949 = vdwg.mxu0
        %v950 = vmax.f32 %v824, 0.0
        %v951 = vmax.f32 %v827, 0.0
        %v952 = vmax.f32 %v832, 0.0
        %v953 = vmax.f32 %v835, 0.0
        %v954 = vmax.f32 %v840, 0.0
        %v955 = vmax.f32 %v843, 0.0
        %v956 = vmax.f32 %v848, 0.0
        %v957 = vmax.f32 %v851, 0.0
        %v958 = vmax.f32 %v856, 0.0
        %v959 = vmax.f32 %v859, 0.0
        %v960 = vmax.f32 %v864, 0.0
        %v961 = vmax.f32 %v867, 0.0
        %v962 = vmax.f32 %v872, 0.0
        %v963 = vmax.f32 %v875, 0.0
        %v964 = vmax.f32 %v880, 0.0
        %v965 = vmax.f32 %v883, 0.0
        %v966 = vmax.f32 %v888, 0.0
        %v967 = vmax.f32 %v891, 0.0
        %v968 = vmax.f32 %v896, 0.0
        %v969 = vmax.f32 %v899, 0.0
        %v970 = vmax.f32 %v904, 0.0
        %v971 = vmax.f32 %v907, 0.0
        %v972 = vmax.f32 %v912, 0.0
        %v973 = vmax.f32 %v915, 0.0
        %v974 = vmax.f32 %v920, 0.0
        %v975 = vmax.f32 %v923, 0.0
        %v976 = vmax.f32 %v928, 0.0
        %v977 = vmax.f32 %v931, 0.0
        %v978 = vmax.f32 %v936, 0.0
        %v979 = vmax.f32 %v939, 0.0
        %v980 = vmax.f32 %v944, 0.0
        %v981 = vmax.f32 %v947, 0.0
        %v982 = vstv %s321
        %v984 = vsel %vm452, %v320, 0
        %v987 = vsel %vm452, %v950, 0
        %v990 = vsel %vm452, %v951, 0
        %v993 = vsel %vm452, %v952, 0
        %v996 = vsel %vm452, %v953, 0
        %v999 = vsel %vm452, %v954, 0
        %v1002 = vsel %vm452, %v955, 0
        %v1005 = vsel %vm452, %v956, 0
        %v1008 = vsel %vm452, %v957, 0
        %v1011 = vsel %vm452, %v958, 0
        %v1014 = vsel %vm452, %v959, 0
        %v1017 = vsel %vm452, %v960, 0
        %v1020 = vsel %vm452, %v961, 0
        %v1023 = vsel %vm452, %v962, 0
        %v1026 = vsel %vm452, %v963, 0
        %v1029 = vsel %vm452, %v964, 0
        %v1032 = vsel %vm452, %v965, 0
        %v1035 = vsel %vm452, %v966, 0
        %v1038 = vsel %vm452, %v967, 0
        %v1041 = vsel %vm452, %v968, 0
        %v1044 = vsel %vm452, %v969, 0
        %v1047 = vsel %vm452, %v970, 0
        %v1050 = vsel %vm452, %v971, 0
        %v1053 = vsel %vm452, %v972, 0
        %v1056 = vsel %vm452, %v973, 0
        %v1059 = vsel %vm452, %v974, 0
        %v1062 = vsel %vm452, %v975, 0
        %v1065 = vsel %vm452, %v976, 0
        %v1068 = vsel %vm452, %v977, 0
        %v1071 = vsel %vm452, %v978, 0
        %v1074 = vsel %vm452, %v979, 0
        %v1077 = vsel %vm452, %v980, 0
        %v1080 = vsel %vm452, %v981, 0
        %1082 = vmatprep.subr.mxu0 0.0
        %1083 = vmatpush1.xpose.msra.mxu0 %v987
        %1084 = vmatprep.subr.mxu0 0.0
        %1085 = vmatpush1.xpose.msra.mxu0 %v990
        %1086 = vmatprep.subr.mxu0 0.0
        %1087 = vmatpush1.xpose.msra.mxu0 %v993
        %1088 = vmatprep.subr.mxu0 0.0
        %1089 = vmatpush1.xpose.msra.mxu0 %v996
        %1090 = vmatprep.subr.mxu0 0.0
        %1091 = vmatpush1.xpose.msra.mxu0 %v999
        %1092 = vmatprep.subr.mxu0 0.0
        %1093 = vmatpush1.xpose.msra.mxu0 %v1002
        %1094 = vmatprep.subr.mxu0 0.0
        %1095 = vmatpush1.xpose.msra.mxu0 %v1005
        %1096 = vmatprep.subr.mxu0 0.0
        %1097 = vmatpush1.xpose.msra.mxu0 %v1008
        %1098 = vmatprep.subr.mxu0 0.0
        %1099 = vmatpush1.xpose.msra.mxu0 %v1011
        %1100 = vmatprep.subr.mxu0 0.0
        %1101 = vmatpush1.xpose.msra.mxu0 %v1014
        %1102 = vmatprep.subr.mxu0 0.0
        %1103 = vmatpush1.xpose.msra.mxu0 %v1017
        %1104 = vmatprep.subr.mxu0 0.0
        %1105 = vmatpush1.xpose.msra.mxu0 %v1020
        %1106 = vmatprep.subr.mxu0 0.0
        %1107 = vmatpush1.xpose.msra.mxu0 %v1023
        %1108 = vmatprep.subr.mxu0 0.0
        %1109 = vmatpush1.xpose.msra.mxu0 %v1026
        %1110 = vmatprep.subr.mxu0 0.0
        %1111 = vmatpush1.xpose.msra.mxu0 %v1029
        %1112 = vmatprep.subr.mxu0 0.0
        %1113 = vmatpush1.xpose.msra.mxu0 %v1032
        %1114 = vmatprep.subr.mxu0 0.0
        %1115 = vmatpush1.xpose.msra.mxu0 %v1035
        %1116 = vmatprep.subr.mxu0 0.0
        %1117 = vmatpush1.xpose.msra.mxu0 %v1038
        %1118 = vmatprep.subr.mxu0 0.0
        %1119 = vmatpush1.xpose.msra.mxu0 %v1041
        %1120 = vmatprep.subr.mxu0 0.0
        %1121 = vmatpush1.xpose.msra.mxu0 %v1044
        %1122 = vmatprep.subr.mxu0 0.0
        %1123 = vmatpush1.xpose.msra.mxu0 %v1047
        %1124 = vmatprep.subr.mxu0 0.0
        %1125 = vmatpush1.xpose.msra.mxu0 %v1050
        %1126 = vmatprep.subr.mxu0 0.0
        %1127 = vmatpush1.xpose.msra.mxu0 %v1053
        %1128 = vmatprep.subr.mxu0 0.0
        %1129 = vmatpush1.xpose.msra.mxu0 %v1056
        %1130 = vmatprep.subr.mxu0 0.0
        %1131 = vmatpush1.xpose.msra.mxu0 %v1059
        %1132 = vmatprep.subr.mxu0 0.0
        %1133 = vmatpush1.xpose.msra.mxu0 %v1062
        %1134 = vmatprep.subr.mxu0 0.0
        %1135 = vmatpush1.xpose.msra.mxu0 %v1065
        %1136 = vmatprep.subr.mxu0 0.0
        %1137 = vmatpush1.xpose.msra.mxu0 %v1068
        %1138 = vmatprep.subr.mxu0 0.0
        %1139 = vmatpush1.xpose.msra.mxu0 %v1071
        %1140 = vmatprep.subr.mxu0 0.0
        %1141 = vmatpush1.xpose.msra.mxu0 %v1074
        %1142 = vmatprep.subr.mxu0 0.0
        %1143 = vmatpush1.xpose.msra.mxu0 %v1077
        %1144 = vmatprep.subr.mxu0 0.0
        %1145 = vmatpush1.xpose.msra.mxu0 %v1080
        %1146 = vmatprep.mubr.f32.mxu0 0.0
        %1147 = vmatmul.mubr.f32.gmra.mrb[0].mxu0 %v984
        %v1148 = vpop.f32.mrb[0].mxu0
        %v1149 = vadd.f32 %v982, %v1148
        %v1150 = vpop.f32.mrb[0].mxu0
        %v1151 = vadd.f32 %v982, %v1150
        %1152 = vdwg.mxu0
        %v1153 = vsub.f32 0.0, %v1149
        %v1154 = vsub.f32 0.0, %v1151
        %v1155 = vmul.f32 %v1153, 1.442695
        %v1156 = vpow.pop %v1155
        %v1157 = vmul.f32 %v1154, 1.442695
        %v1158 = vpow.pop %v1157
        %v1159 = vadd.f32 %v1156, 1.0
        %v1160 = vadd.f32 %v1158, 1.0
        %v1161 = vrcp.pop %v1159
        %v1162 = vrcp.pop %v1160
        %v1165 = vcombine.low %v1161, %v1162
        %v1167 = vunpack.c.l.s4 1966171168
        %v1168 = vunpack.c.0.s8 %v1167
        %v1169 = vlaneseq
        %v1170 = vshrl.u32 %v1169, 7
        %v1171 = vsub.s32 %v1168, %v1170
        %v1172 = vrot.slane %v1165, %v1171
        %v1174 = vunpack.c.l.s4 1966171168
        %v1175 = vunpack.c.0.s8 %v1174
        %v1176 = vlaneseq
        %v1177 = vshrl.u32 %v1176, 7
        %v1178 = vsub.s32 %v1175, %v1177
        %v1179 = vrot.slane %v1172, %v1178
        %v1181 = vlaneseq
        %vm1182 = vcmp.ge.s32.totalorder %v1181, 0
        %vm1183 = vcmp.lt.s32.totalorder %v1181, 256
        %vm1184 = vmand %vm1182, %vm1183
        %1185 = vst.msk [vmem:[%s285] sm:$0x3] %vm1184, %v1179
        %s1186 = sand.u32 %s182, 1
        %s1187 = scalar_lea.sflag [#allocation4], %s1186
        %s1188 = sand.u32 %s182, 1
        %s1189 = smul.addr %s1188, 2
        %s1190 = scalar_lea.vmem [#allocation3], %s1189
        // Predicated region
        $region49: #{tpu_custom_call.1} parent=47 // pred_check
          %p1191 = pneg %p192
        $region50: #{tpu_custom_call.1} parent=47 // pred_check_branch
          %1193 = sbr.rel (%p1191) target = $region52
        $region51: #{tpu_custom_call.1} parent=47 // pred_region
          %s1194 = smul.u32 2, %s22
          %s1195 = ssub.s32 3, %s1194
          %p1196 = scmp.lt.s32.totalorder %s1195, 2
          %s1197 = scalar_select %p1196, %s1195, 2
          %s1198 = smul.u32 16, %s1197
          %s1200 = ssub.s32 32, %s1198
          %1201 = vsyncadd %s1187, %s1200
          %p1202 = scmp.ne.s32.totalorder 0, %s1198
          %s1203 = smul.addr %s1194, 16
          %s1204 = scalar_lea.hbm %s7, %s1203
          %s1205 = sshll.u32 %s1197, 4
          %s1206 = sshll.u32 %s1190, 4
          %s1207 = int_to_ptr.vmem [resolvable:$true] %s1206
          %1209 = dma.vmem_to_hbm [thread:$0]  (%p1202), %s1207, %s1205, %s1204, %s1187
        $region52: #{tpu_custom_call.1} parent=47 // pred_fallthru
          _
      $region48: #{tpu_custom_call.1} parent=5 // pred_fallthru
        _
      %p1210 = scmp.le.s32.totalorder 2, %s17
      // Predicated region
      $region53: #{tpu_custom_call.1} parent=5 // pred_check
        %p1211 = pneg %p1210
      $region54: #{tpu_custom_call.1} parent=5 // pred_check_branch
        %1213 = sbr.rel (%p1211) target = $region56
      $region55: #{tpu_custom_call.1} parent=5 // pred_region
        %s1214 = ssub.s32 %s17, 2
        // Predicated region
        $region57: #{tpu_custom_call.1} parent=55 // pred_check
          %p1215 = pneg %p198
        $region58: #{tpu_custom_call.1} parent=55 // pred_check_branch
          %1217 = sbr.rel (%p1215) target = $region60
        $region59: #{tpu_custom_call.1} parent=55 // pred_region
          %s1218 = sand.u32 %s183, 1
          %s1219 = scalar_lea.sflag [#allocation4], %s1218
          %s1220 = sand.u32 %s183, 1
          %s1221 = smul.addr %s1220, 2
          %s1222 = scalar_lea.vmem [#allocation3], %s1221
          %1223 = dma.done %s1219, 32
        $region60: #{tpu_custom_call.1} parent=55 // pred_fallthru
          _
      $region56: #{tpu_custom_call.1} parent=5 // pred_fallthru
        _
    $region6: #{tpu_custom_call.1} parent=1 // loop_footer
      %s21 = sadd.s32 1, %s17
    $region7: #{tpu_custom_call.1} parent=1 // loop_footer_branch
      %16 = sbr.rel target = $region3
    $region8: #{tpu_custom_call.1} parent=1 // loop_exit
      _
    %1224 = vsyncpa [#allocation4], 1
    %s1225 = scalar_lea.sflag [#allocation4], 1
    %1226 = vsyncpa %s1225, 1

</llo_original>
